<compile_context>
chip_gen: v5e
topology: v5e:2x2
jax: 0.10.0
libtpu: 0.0.40
codegen_flags: <defaults>
</compile_context>

<pallas_src>
import jax
import jax.numpy as jnp
from jax.experimental import pallas as pl
from jax.experimental.pallas import tpu as pltpu


def _identity_copy_kernel(x_hbm_ref, o_hbm_ref, sem):
    # One whole-array HBM -> HBM DMA; no VMEM staging, no grid loop.
    cp = pltpu.make_async_copy(x_hbm_ref, o_hbm_ref, sem)
    cp.start()
    cp.wait()


def _identity_copy(one_hots: jax.Array) -> jax.Array:
    nbytes = one_hots.size * jnp.dtype(one_hots.dtype).itemsize
    return pl.pallas_call(
        _identity_copy_kernel,
        out_shape=jax.ShapeDtypeStruct(one_hots.shape, one_hots.dtype),
        in_specs=[pl.BlockSpec(memory_space=pl.ANY)],   # stay in HBM
        out_specs=pl.BlockSpec(memory_space=pl.ANY),    # stay in HBM
        scratch_shapes=[pltpu.SemaphoreType.DMA],       # DMA completion sem
        cost_estimate=pl.CostEstimate(
            flops=0, transcendentals=0, bytes_accessed=2 * nbytes
        ),
    )(one_hots)


@jax.custom_vjp
def identity_embedding(one_hots: jax.Array) -> jax.Array:
    """Pallas equivalent of IdentityEmbedding.forward.

    Args:
        one_hots: float array of shape [batch_size, max_sequence_len, vocab_size].

    Returns:
        The same values, produced through a single HBM->HBM DMA.
    """
    # TODO(synk): PyTorch's `self.one_hots = x.requires_grad_()` caching
    # side-effect has no functional-JAX equivalent; gradient flow is provided
    # via the custom_vjp below (backward of identity is identity).
    return _identity_copy(one_hots)


def _identity_fwd(one_hots):
    return _identity_copy(one_hots), None


def _identity_bwd(_, g):
    return (g,)


identity_embedding.defvjp(_identity_fwd, _identity_bwd)


if __name__ == "__main__":
    key = jax.random.PRNGKey(0)
    batch_size, max_sequence_len, vocab_size = 2, 8, 32

    # Deterministic synthetic one-hot input [batch, seq, vocab].
    token_ids = jax.random.randint(
        key, (batch_size, max_sequence_len), 0, vocab_size
    )
    one_hots = jax.nn.one_hot(token_ids, vocab_size, dtype=jnp.float32)

    # Forward pass through the Pallas kernel.
    out = identity_embedding(one_hots)
    out = jax.block_until_ready(out)

    assert out.shape == one_hots.shape
    assert out.dtype == one_hots.dtype
    expected = jax.nn.one_hot(token_ids, vocab_size, dtype=jnp.float32)
    assert bool(jnp.array_equal(out, expected))

    # Gradient check: backward of identity is identity.
    grads = jax.grad(lambda x: identity_embedding(x).sum())(one_hots)
    grads = jax.block_until_ready(grads)
    assert bool(jnp.array_equal(grads, jnp.ones_like(one_hots)))

    print("KERNEL_OK")
</pallas_src>

<mosaic_0001>
module attributes {stable_mosaic.version = 11 : i64} {
  func.func @_identity_copy_kernel(%arg0: memref<2x8x32xf32, #tpu.memory_space<any>>, %arg1: memref<2x8x32xf32, #tpu.memory_space<any>>, %arg2: memref<!tpu.dma_semaphore, #tpu.memory_space<semaphore_mem>>) attributes {dimension_semantics = [], scalar_prefetch = 0 : i64, scratch_operands = 1 : i64, tpu.core_type = #tpu.core_type<tc>} {
    tpu.enqueue_dma source(%arg0 : memref<2x8x32xf32, #tpu.memory_space<any>>) target(%arg1 : memref<2x8x32xf32, #tpu.memory_space<any>>) target_semaphore(%arg2 : memref<!tpu.dma_semaphore, #tpu.memory_space<semaphore_mem>>)
    tpu.wait_dma2 semaphore(%arg2 : memref<!tpu.dma_semaphore, #tpu.memory_space<semaphore_mem>>) src(%arg0 : memref<2x8x32xf32, #tpu.memory_space<any>>) dst(%arg1 : memref<2x8x32xf32, #tpu.memory_space<any>>)
    return
  }
}

</mosaic_0001>

<llo_original>
// kernel: tpu_custom_call.1
$region0: #{tpu_custom_call.1}
  #allocation0 [shape = 'u32[]', space=smem, size = 0x4, offset = 0x4, fixed_abs, tag = 'smem constant byte address 0x4 - core index']
  #allocation1 [shape = 'u32[72,128]{1,0:T(1,128)}', space=vmem, size = 0x9000, scoped, tag = 'internal scratch']
  #allocation2 [shape = 's32[1]{0}', space=sflag, size = 0x4, scoped, tag = 'scratch operand']
  #allocation3 [shape = 's32[]', space=sflag, size = 0x4, offset = 0, fixed_abs, tag = 'sflag constant byte address 0x0 - dummy sync flag']
  #allocation4 [shape = 'u32[0]{0}', space=smem, size = 0, offset = 0, fixed_abs, tag = 'smem constant byte address 0x0 - null']
  %s0 = inlined_call_operand.hbm [shape: f32[2,8,32], index: 0, kind: input, shape index: {}]
  %s1 = inlined_call_operand.hbm [shape: f32[2,8,32], index: 1, kind: output, shape index: {}]
  %s2 = sld [smem:[#allocation0]]
  $region2: #{tpu_custom_call.1} parent=0
    _
  %s4 = ssub.s32 1, %s2
  %s5 = scalar_select 0, %s4, %s2
  %s7 = sshll.u32 1, 14
  %s8 = sxor.u32 4294967295, %s7
  %s10 = sshll.u32 %s0, 4
  %s11 = int_to_ptr.hbm [resolvable:$true] %s10
  %s12 = sshll.u32 %s1, 4
  %s13 = int_to_ptr.hbm [resolvable:$true] %s12
  %16 = dma.general %s11, 256, %s13, [#allocation2], [#allocation3], [#allocation4], 0, 0
  %s17 = smul.u32 2, 8
  %s18 = smul.u32 %s17, 1
  %s19 = sshll.u32 %s18, 4
  %20 = dma.done [#allocation2], %s19
  %21 = vsyncmov [#allocation2]
  %s22 = vpop.sfrf %21
  %p23 = scmp.eq.s32.totalorder %s22, 0
  %p24 = pneg %p23
  %26 = shalt.err (%p24)

</llo_original>
